<compile_context>
chip_gen: v6e
topology: v6e:2x2x1
jax: 0.10.0
libtpu: 0.0.40
codegen_flags: <defaults>
</compile_context>

<pallas_src>
import functools

import jax
import jax.numpy as jnp
from jax.experimental import pallas as pl
from jax.experimental.pallas import tpu as pltpu


def _round_up(x, m):
    return ((x + m - 1) // m) * m


def _apply_nonlinearity(d, nonlinearity):
    if nonlinearity == "square":
        return d * d
    if nonlinearity == "abs":
        return jnp.abs(d)
    return d


# ----------------------------------------------------------------------------
# Kernels
# ----------------------------------------------------------------------------
def _sub_embed_sum_kernel(x1_ref, x2_ref, o_ref, *, nonlinearity):
    """(x1 - x2) -> nonlinearity -> sum over features -> clamp -> sqrt."""
    d = _apply_nonlinearity(x1_ref[...] - x2_ref[...], nonlinearity)
    s = jnp.sum(d, axis=1, keepdims=True)                    # (TB, 1)
    o_ref[...] = jnp.sqrt(jnp.maximum(s, 1e-12))


def _bn_stats_kernel(x1_ref, x2_ref, sum_ref, sumsq_ref, *, nonlinearity):
    """Pass 1: accumulate per-feature sum and sum-of-squares over batch tiles."""
    @pl.when(pl.program_id(0) == 0)
    def _():
        sum_ref[...] = jnp.zeros_like(sum_ref)
        sumsq_ref[...] = jnp.zeros_like(sumsq_ref)

    d = _apply_nonlinearity(x1_ref[...] - x2_ref[...], nonlinearity)
    sum_ref[...] += jnp.sum(d, axis=0, keepdims=True)          # (1, F)
    sumsq_ref[...] += jnp.sum(d * d, axis=0, keepdims=True)    # (1, F)


def _bn_classifier_kernel(x1_ref, x2_ref, sum_ref, sumsq_ref, w_ref, b_ref,
                          o_ref, *, nonlinearity, apply_bn, bn_eps, inv_count):
    """Pass 2: nonlinearity -> (optional BN with full-batch stats) -> Linear."""
    d = _apply_nonlinearity(x1_ref[...] - x2_ref[...], nonlinearity)
    if apply_bn:
        mean = sum_ref[...] * inv_count                        # (1, F)
        var = sumsq_ref[...] * inv_count - mean * mean         # biased variance
        d = (d - mean) * jax.lax.rsqrt(var + bn_eps)
    # Weight is pre-transposed to (F, C) by the wrapper -> no in-kernel .T
    y = jnp.dot(d, w_ref[...], preferred_element_type=jnp.float32)
    o_ref[...] = (y + b_ref[...]).astype(o_ref.dtype)


# ----------------------------------------------------------------------------
# Wrapper
# ----------------------------------------------------------------------------
def eltwise_sub_embed(x1, x2, *, nonlinearity="square",
                      use_batch_norm=False, use_classifier=False,
                      weight=None, bias=None, bn_eps=1e-5,
                      max_batch_tile=512):
    """Pallas implementation of EltwiseSubEmbed.forward."""
    assert x1.shape == x2.shape and x1.ndim == 2
    if nonlinearity is not None and nonlinearity not in ("square", "abs"):
        raise KeyError("Unknown nonlinearity:", nonlinearity)

    B, F = x1.shape
    f32 = jnp.float32

    # Lane-dense feature axis (pad F to a multiple of 128). Zero-padded columns
    # contribute exactly 0 to the sum / BN stats / matmul, so results are exact.
    F_pad = _round_up(F, 128)

    # Batch tile: multiple of 8; sized so the two double-buffered input streams
    # stay well within scoped VMEM on v5e/v6e/v7x.
    vmem_input_budget = 8 * 1024 * 1024
    tb_cap = max(8, (vmem_input_budget // (2 * 2 * F_pad * 4)) // 8 * 8)
    TB = min(_round_up(B, 8), max_batch_tile, tb_cap)
    B_pad = _round_up(B, TB)
    n_tiles = B_pad // TB

    x1p = jnp.pad(x1.astype(f32), ((0, B_pad - B), (0, F_pad - F)))
    x2p = jnp.pad(x2.astype(f32), ((0, B_pad - B), (0, F_pad - F)))

    in_tile_spec = pl.BlockSpec((TB, F_pad), lambda i: (i, 0))
    vmem_limit = 32 * 1024 * 1024

    if not use_classifier:
        if use_batch_norm:
            # TODO(synk): BN-only (use_batch_norm=True, use_classifier=False)
            # config not implemented; it would reuse the stats pass + a
            # normalize-then-sum kernel.
            raise NotImplementedError("BatchNorm without classifier not implemented")
        out = pl.pallas_call(
            functools.partial(_sub_embed_sum_kernel, nonlinearity=nonlinearity),
            out_shape=jax.ShapeDtypeStruct((B_pad, 1), f32),
            grid=(n_tiles,),
            in_specs=[in_tile_spec, in_tile_spec],
            out_specs=pl.BlockSpec((TB, 1), lambda i: (i, 0)),
            compiler_params=pltpu.CompilerParams(
                dimension_semantics=("parallel",),
                vmem_limit_bytes=vmem_limit),
            cost_estimate=pl.CostEstimate(
                flops=3 * B_pad * F_pad,
                transcendentals=B_pad,
                bytes_accessed=2 * B_pad * F_pad * 4 + B_pad * 4),
        )(x1p, x2p)
        return out[:B, 0]                      # (B,), matching torch's x.sum(1)

    # ---------------- classifier path ----------------
    assert weight is not None and bias is not None
    C = weight.shape[0]
    C_pad = _round_up(C, 128)

    # Pre-transpose weight to (F, C) (MXU-preferred RHS) and pad to lane-dense
    # (F_pad, C_pad). Padded weight rows/cols are zero -> exact result.
    w_t = jnp.pad(weight.astype(f32).T, ((0, F_pad - F), (0, C_pad - C)))
    b2d = jnp.pad(bias.astype(f32).reshape(1, C), ((0, 0), (0, C_pad - C)))

    stats_spec = pl.BlockSpec((1, F_pad), lambda i: (0, 0))

    if use_batch_norm:
        # Pass 1: full-batch per-feature statistics (accumulated over tiles,
        # so batch tiling does not change BN semantics).
        feat_sum, feat_sumsq = pl.pallas_call(
            functools.partial(_bn_stats_kernel, nonlinearity=nonlinearity),
            out_shape=(jax.ShapeDtypeStruct((1, F_pad), f32),
                       jax.ShapeDtypeStruct((1, F_pad), f32)),
            grid=(n_tiles,),
            in_specs=[in_tile_spec, in_tile_spec],
            out_specs=(stats_spec, stats_spec),
            compiler_params=pltpu.CompilerParams(
                dimension_semantics=("arbitrary",),
                vmem_limit_bytes=vmem_limit),
            cost_estimate=pl.CostEstimate(
                flops=5 * B_pad * F_pad,
                transcendentals=0,
                bytes_accessed=2 * B_pad * F_pad * 4 + 2 * F_pad * 4),
        )(x1p, x2p)
    else:
        feat_sum = jnp.zeros((1, F_pad), f32)
        feat_sumsq = jnp.zeros((1, F_pad), f32)

    # Pass 2: normalize (full-batch stats) + lane-dense MXU matmul.
    out = pl.pallas_call(
        functools.partial(_bn_classifier_kernel,
                          nonlinearity=nonlinearity,
                          apply_bn=use_batch_norm,
                          bn_eps=bn_eps,
                          inv_count=1.0 / B),
        out_shape=jax.ShapeDtypeStruct((B_pad, C_pad), f32),
        grid=(n_tiles,),
        in_specs=[in_tile_spec, in_tile_spec,
                  stats_spec, stats_spec,
                  pl.BlockSpec((F_pad, C_pad), lambda i: (0, 0)),
                  pl.BlockSpec((1, C_pad), lambda i: (0, 0))],
        out_specs=pl.BlockSpec((TB, C_pad), lambda i: (i, 0)),
        compiler_params=pltpu.CompilerParams(
            dimension_semantics=("parallel",),
            vmem_limit_bytes=vmem_limit),
        cost_estimate=pl.CostEstimate(
            flops=2 * B_pad * F_pad * C_pad + 6 * B_pad * F_pad,
            transcendentals=0,
            bytes_accessed=(2 * B_pad * F_pad + F_pad * C_pad
                            + B_pad * C_pad + 2 * F_pad + C_pad) * 4),
    )(x1p, x2p, feat_sum, feat_sumsq, w_t, b2d)
    return out[:B, :C]


# ----------------------------------------------------------------------------
# Pure-JAX reference for verification
# ----------------------------------------------------------------------------
def _reference(x1, x2, *, nonlinearity, use_batch_norm, use_classifier,
               weight=None, bias=None, bn_eps=1e-5):
    x = x1 - x2
    if nonlinearity == "square":
        x = x ** 2
    elif nonlinearity == "abs":
        x = jnp.abs(x)
    if use_batch_norm:
        mean = jnp.mean(x, axis=0, keepdims=True)
        var = jnp.var(x, axis=0, keepdims=True)
        x = (x - mean) / jnp.sqrt(var + bn_eps)
    if use_classifier:
        x = x @ weight.T + bias
    else:
        x = jnp.sum(x, axis=1)
        x = jnp.sqrt(jnp.maximum(x, 1e-12))
    return x


# ----------------------------------------------------------------------------
# Main
# ----------------------------------------------------------------------------
if __name__ == "__main__":
    key = jax.random.PRNGKey(0)
    k1, k2, kw = jax.random.split(key, 3)

    B, F, C = 8, 32, 16
    x1 = jax.random.normal(k1, (B, F), dtype=jnp.float32)
    x2 = jax.random.normal(k2, (B, F), dtype=jnp.float32)

    # Parameter init matching the module's __init__:
    #   classifier.weight ~ N(0, 0.001), classifier.bias = 0, bn gamma=1/beta=0.
    weight = 0.001 * jax.random.normal(kw, (C, F), dtype=jnp.float32)
    bias = jnp.zeros((C,), dtype=jnp.float32)

    # Config 1: default (square, no BN, no classifier) -> (B,)
    out_default = eltwise_sub_embed(x1, x2, nonlinearity="square")
    out_default = jax.block_until_ready(out_default)
    ref_default = _reference(x1, x2, nonlinearity="square",
                             use_batch_norm=False, use_classifier=False)
    assert out_default.shape == (B,)
    assert jnp.allclose(out_default, ref_default, rtol=1e-5, atol=1e-5)

    # Config 2: square + BatchNorm1d + Linear classifier -> (B, C)
    out_cls = eltwise_sub_embed(x1, x2, nonlinearity="square",
                                use_batch_norm=True, use_classifier=True,
                                weight=weight, bias=bias)
    out_cls = jax.block_until_ready(out_cls)
    ref_cls = _reference(x1, x2, nonlinearity="square",
                         use_batch_norm=True, use_classifier=True,
                         weight=weight, bias=bias)
    assert out_cls.shape == (B, C)
    assert jnp.allclose(out_cls, ref_cls, rtol=1e-4, atol=1e-5)

    print("KERNEL_OK")
</pallas_src>

<mosaic_0001>
module attributes {stable_mosaic.version = 11 : i64} {
  func.func @_sub_embed_sum_kernel(%arg0: i32, %arg1: memref<8x128xf32, #tpu.memory_space<vmem>>, %arg2: memref<8x128xf32, #tpu.memory_space<vmem>>, %arg3: memref<8x1xf32, #tpu.memory_space<vmem>>) attributes {dimension_semantics = [#tpu.dimension_semantics<parallel>], iteration_bounds = array<i64: 1>, scalar_prefetch = 0 : i64, scratch_operands = 0 : i64, tpu.core_type = #tpu.core_type<tc>, window_params = [{transform_indices = @transform_0, window_bounds = array<i64: 8, 128>}, {transform_indices = @transform_1, window_bounds = array<i64: 8, 128>}, {transform_indices = @transform_2, window_bounds = array<i64: 8, 1>}]} {
    %c0 = arith.constant 0 : index
    %c0_0 = arith.constant 0 : index
    %0 = vector.load %arg1[%c0, %c0_0] : memref<8x128xf32, #tpu.memory_space<vmem>>, vector<8x128xf32>
    %c0_1 = arith.constant 0 : index
    %c0_2 = arith.constant 0 : index
    %1 = vector.load %arg2[%c0_1, %c0_2] : memref<8x128xf32, #tpu.memory_space<vmem>>, vector<8x128xf32>
    %2 = arith.subf %0, %1 : vector<8x128xf32>
    %3 = arith.mulf %2, %2 : vector<8x128xf32>
    %cst = arith.constant dense<0.000000e+00> : vector<8xf32>
    %4 = vector.multi_reduction <add>, %3, %cst [1] : vector<8x128xf32> to vector<8xf32>
    %5 = vector.shape_cast %4 : vector<8xf32> to vector<8x1xf32>
    %cst_3 = arith.constant 9.99999996E-13 : f32
    %6 = vector.broadcast %cst_3 : f32 to vector<8x1xf32>
    %7 = arith.maximumf %5, %6 : vector<8x1xf32>
    %8 = math.sqrt %7 : vector<8x1xf32>
    %c0_4 = arith.constant 0 : index
    %c0_5 = arith.constant 0 : index
    %9 = vector.load %arg3[%c0_4, %c0_5] : memref<8x1xf32, #tpu.memory_space<vmem>>, vector<8x1xf32>
    tpu.vector_store %arg3[%c0_4, %c0_5], %8 {strides = array<i32>} : memref<8x1xf32, #tpu.memory_space<vmem>>, vector<8x1xf32>,
    return
  }
  func.func @transform_0(%arg0: i32) -> (i32, i32) {
    %c0_i32 = arith.constant 0 : i32
    %c0_i32_0 = arith.constant 0 : i32
    return %arg0, %c0_i32 : i32, i32
  }
  func.func @transform_1(%arg0: i32) -> (i32, i32) {
    %c0_i32 = arith.constant 0 : i32
    %c0_i32_0 = arith.constant 0 : i32
    return %arg0, %c0_i32 : i32, i32
  }
  func.func @transform_2(%arg0: i32) -> (i32, i32) {
    %c0_i32 = arith.constant 0 : i32
    %c0_i32_0 = arith.constant 0 : i32
    return %arg0, %c0_i32 : i32, i32
  }
}

</mosaic_0001>

<llo_original>
// kernel: tpu_custom_call.1
$region0: #{tpu_custom_call.1}
  #allocation0 [shape = 'u32[]', space=smem, size = 0x4, offset = 0x4, fixed_abs, tag = 'smem constant byte address 0x4 - core index']
  #allocation1 [shape = 'u32[144,128]{1,0:T(1,128)}', space=vmem, size = 0x12000, scoped, tag = 'internal scratch']
  %s0 = inlined_call_operand.hbm [shape: f32[8,128], index: 0, kind: input, shape index: {}]
  %s1 = inlined_call_operand.hbm [shape: f32[8,128], index: 1, kind: input, shape index: {}]
  %s2 = inlined_call_operand.vmem [shape: f32[8,1], index: 2, kind: output, shape index: {}]
  %s3 = sld [smem:[#allocation0]]
  $region26: #{tpu_custom_call.1} parent=0
    _
  %s5 = ssub.s32 1, %s3
  %s6 = scalar_select 0, %s5, %s3
  $region1: #{tpu_custom_call.1} parent=0
    #allocation2 [shape = 'u8[4096]{0}', space=vmem, size = 0x1000, scoped, tag = 'input window, operand 0, single buffered']
    #allocation3 [shape = 's32[1]{0}', space=sflag, size = 0x4, scoped, tag = 'scoped memory for tpu_custom_call.1']
    #allocation4 [shape = 'u8[4096]{0}', space=vmem, size = 0x1000, scoped, tag = 'input window, operand 1, single buffered']
    #allocation5 [shape = 's32[1]{0}', space=sflag, size = 0x4, scoped, tag = 'scoped memory for tpu_custom_call.1']
    %7 = vsyncpa [#allocation3], 0
    %8 = vsyncpa [#allocation5], 0
    // Predicated region
    $region2: #{tpu_custom_call.1} parent=1 // pred_check
      _
    $region3: #{tpu_custom_call.1} parent=1 // pred_check_branch
      %10 = sbr.rel (0) target = $region5
    $region4: #{tpu_custom_call.1} parent=1 // pred_region
      %s12 = ssub.s32 128, 128
      %13 = vsyncadd [#allocation3], %s12
      %s15 = sshll.u32 [#allocation2], 4
      %s16 = int_to_ptr.vmem [resolvable:$true] %s15
      %18 = dma.hbm_to_vmem [thread:$0]  %s0, 128, %s16, [#allocation3]
    $region5: #{tpu_custom_call.1} parent=1 // pred_fallthru
      _
    // Predicated region
    $region6: #{tpu_custom_call.1} parent=1 // pred_check
      _
    $region7: #{tpu_custom_call.1} parent=1 // pred_check_branch
      %20 = sbr.rel (0) target = $region9
    $region8: #{tpu_custom_call.1} parent=1 // pred_region
      %s22 = ssub.s32 128, 128
      %23 = vsyncadd [#allocation5], %s22
      %s25 = sshll.u32 [#allocation4], 4
      %s26 = int_to_ptr.vmem [resolvable:$true] %s25
      %28 = dma.hbm_to_vmem [thread:$0]  %s1, 128, %s26, [#allocation5]
    $region9: #{tpu_custom_call.1} parent=1 // pred_fallthru
      _
    // Predicated region
    $region10: #{tpu_custom_call.1} parent=1 // pred_check
      _
    $region11: #{tpu_custom_call.1} parent=1 // pred_check_branch
      %30 = sbr.rel (0) target = $region13
    $region12: #{tpu_custom_call.1} parent=1 // pred_region
      %31 = dma.done [#allocation3], 128
    $region13: #{tpu_custom_call.1} parent=1 // pred_fallthru
      _
    // Predicated region
    $region14: #{tpu_custom_call.1} parent=1 // pred_check
      _
    $region15: #{tpu_custom_call.1} parent=1 // pred_check_branch
      %33 = sbr.rel (0) target = $region17
    $region16: #{tpu_custom_call.1} parent=1 // pred_region
      %34 = dma.done [#allocation5], 128
    $region17: #{tpu_custom_call.1} parent=1 // pred_fallthru
      _
    %v35 = vld [vmem:[#allocation2] sm:$0xff]
    %v36 = vld [vmem:[#allocation4] sm:$0xff]
    %v37 = vsub.f32 %v35, %v36
    %v38 = vmul.f32 %v37, %v37
    %39 = vadd.xlane.f32.xlu0 %v38
    %v40 = vpop.xlane.xlu0 %39
    %v41 = vmax.f32 %v40, 1e-12
    %v42 = vrsqrt.pop %v41
    %v43 = vmul.f32 %v41, %v42
    %vm44 = vcmp.eq.f32.partialorder %v41, inf
    %v45 = vsel %vm44, %v41, %v43
    %vm46 = vcmp.eq.f32.partialorder %v41, 0.0
    %v47 = vand.u32 %v41, 2147483648
    %v48 = vsel %vm46, %v47, %v45
    %vm49 = vcmask 7168
    %50 = vst.msk [vmem:[%s2] sm:$0xff] %vm49, %v48
    // Predicated region
    $region18: #{tpu_custom_call.1} parent=1 // pred_check
      _
    $region19: #{tpu_custom_call.1} parent=1 // pred_check_branch
      %52 = sbr.rel (0) target = $region21
    $region20: #{tpu_custom_call.1} parent=1 // pred_region
      _
    $region21: #{tpu_custom_call.1} parent=1 // pred_fallthru
      _
    // Predicated region
    $region22: #{tpu_custom_call.1} parent=1 // pred_check
      _
    $region23: #{tpu_custom_call.1} parent=1 // pred_check_branch
      %54 = sbr.rel (0) target = $region25
    $region24: #{tpu_custom_call.1} parent=1 // pred_region
      _
    $region25: #{tpu_custom_call.1} parent=1 // pred_fallthru
      _
    %55 = vsyncpa [#allocation3], 1
    %56 = vsyncpa [#allocation5], 1

</llo_original>
